<compile_context>
chip_gen: v7x
topology: tpu7x:2x2x1
jax: 0.10.0
libtpu: 0.0.40
codegen_flags: <defaults>
</compile_context>

<pallas_src>
import math

import jax
import jax.numpy as jnp
from jax.experimental import pallas as pl
from jax.experimental.pallas import tpu as pltpu


def _dim_emb_kernel(x_ref, freq_ref, phase_ref, o_ref):
    # x_ref:     (TM, G)   G packed x-values per output row
    # freq_ref:  (1, L)    [freqs | freqs] tiled G times,  L = G * 2*dim
    # phase_ref: (1, L)    [0..0 | pi/2..pi/2] tiled G times
    # o_ref:     (TM, L)   lane-dense store (L % 128 == 0 when packed)
    x = x_ref[...]
    tm, g = x.shape
    lanes = o_ref.shape[-1]
    two_dim = lanes // g
    if g == 1:
        xw = jnp.broadcast_to(x, (tm, lanes))
    else:
        # Lane-expand each packed value across its 2*dim lanes, then
        # concatenate along lanes (XLU work — idle slot here, ~free).
        parts = [jnp.broadcast_to(x[:, i:i + 1], (tm, two_dim)) for i in range(g)]
        xw = jnp.concatenate(parts, axis=-1)          # (TM, L)
    # cos(t) == sin(t + pi/2): one full-lane-width sin covers both halves.
    # TODO(synk): if a v7x bundle dump shows VALU as the binding slot, drop the
    # duplicated multiply/phase-add by computing t = x*freqs once per dim lanes
    # and interleaving sin(t)/cos(t) via lane shuffles.
    o_ref[...] = jnp.sin(xw * freq_ref[...] + phase_ref[...]).astype(o_ref.dtype)


def _round_up(v, m):
    return ((v + m - 1) // m) * m


def _choose_tile_rows(rows, lane_width, group, out_itemsize,
                      target_tile_bytes, vmem_budget_bytes, min_grid_steps=2):
    """Pick the row-tile: ~target_tile_bytes output tile, VMEM-capped,
    sublane aligned, and >= min_grid_steps grid steps for non-tiny problems
    (so v7x can shard the parallel axis across its two TensorCores)."""
    per_row_vmem = 2 * lane_width * out_itemsize + 2 * group * 4   # double-buffered out + in
    vmem_rows = max(8, vmem_budget_bytes // per_row_vmem)
    target_rows = max(8, target_tile_bytes // (lane_width * out_itemsize))
    tm = min(target_rows, vmem_rows)
    rows_aligned = _round_up(max(rows, 1), 8)
    if rows_aligned >= 8 * min_grid_steps:
        tm = min(tm, rows_aligned // min_grid_steps)
    tm = max(8, (tm // 8) * 8)
    tm = min(tm, rows_aligned)
    return tm


def dimension_embedding(x, *, dim, freq,
                        target_tile_bytes=2 << 20,       # ~2 MiB output tile / step
                        vmem_budget_bytes=16 << 20,       # safe under v7x 32 MiB scoped VMEM
                        out_dtype=jnp.float32,            # bf16 recommended on v5e/v6e consumers
                        max_lane_width=2048):
    """Pallas implementation of DimensionEmbedding.forward.

    x: (B, N) float array.  Returns (B, N * 2 * dim) in `out_dtype`.
    """
    assert dim > 1, "dim == 1 divides by zero (same limitation as the PyTorch module)"
    B, N = x.shape
    M = B * N
    two_dim = 2 * dim
    out_itemsize = jnp.dtype(out_dtype).itemsize

    # Lane packing: L lanes per output row, G x-values per row.
    L = math.lcm(two_dim, 128)
    if L > max_lane_width:
        L = two_dim           # awkward dims: fall back to unpacked (masked) stores
    G = L // two_dim

    # Parameter-free "weights": inverse-frequency row (duplicated for the cos
    # half via a pi/2 phase), tiled across the G packed groups.
    log_scale = math.log(float(freq)) / float(dim - 1)
    freqs = jnp.exp(jnp.arange(dim, dtype=jnp.float32) * jnp.float32(-log_scale))
    freq_row = jnp.tile(jnp.concatenate([freqs, freqs]), (G,)).reshape(1, L)
    phase_one = jnp.concatenate(
        [jnp.zeros((dim,), jnp.float32),
         jnp.full((dim,), jnp.float32(math.pi / 2), dtype=jnp.float32)])
    phase_row = jnp.tile(phase_one, (G,)).reshape(1, L)

    # Row tiling over packed rows; pad ragged counts and slice the result.
    rows = -(-M // G)                                    # cdiv
    tm = _choose_tile_rows(rows, L, G, out_itemsize,
                           target_tile_bytes, vmem_budget_bytes)
    Rp = _round_up(max(rows, 1), tm)
    grid = (Rp // tm,)

    x_flat = x.reshape(-1).astype(jnp.float32)
    pad_vals = Rp * G - M
    if pad_vals:
        x_flat = jnp.pad(x_flat, (0, pad_vals))          # tail computed, then discarded
    x2 = x_flat.reshape(Rp, G)

    cost = pl.CostEstimate(
        flops=2 * M * two_dim,                           # mul + add per output element
        transcendentals=M * two_dim,
        bytes_accessed=4 * M + out_itemsize * M * two_dim,
    )

    out = pl.pallas_call(
        _dim_emb_kernel,
        out_shape=jax.ShapeDtypeStruct((Rp, L), out_dtype),
        grid=grid,
        in_specs=[
            pl.BlockSpec((tm, G), lambda i: (i, 0)),     # packed x rows
            pl.BlockSpec((1, L), lambda i: (0, 0)),      # freq row (replicated)
            pl.BlockSpec((1, L), lambda i: (0, 0)),      # phase row (replicated)
        ],
        out_specs=pl.BlockSpec((tm, L), lambda i: (i, 0)),
        compiler_params=pltpu.CompilerParams(
            dimension_semantics=("parallel",)),
        cost_estimate=cost,
    )(x2, freq_row, phase_row)

    # Packed rows are the flat row-major output; slice off padding and reshape.
    out_flat = out.reshape(-1)[: M * two_dim]
    return out_flat.reshape(B, N * two_dim)


def _reference(x, *, dim, freq):
    """Pure-JAX reference mirroring the PyTorch forward (f32)."""
    log_scale = math.log(float(freq)) / float(dim - 1)
    freqs = jnp.exp(jnp.arange(dim, dtype=jnp.float32) * jnp.float32(-log_scale))
    emb = x.astype(jnp.float32)[:, :, None] * freqs[None, None, :]
    emb = jnp.concatenate([jnp.sin(emb), jnp.cos(emb)], axis=-1)
    return emb.reshape(emb.shape[0], -1)


if __name__ == "__main__":
    DIM = 32          # self.dim
    FREQ = 10000.0    # self.freq

    key = jax.random.PRNGKey(0)

    # Case 1: module-sized example (batch=2, num_values=8); two_dim=64 -> G=2, L=128.
    x1 = jax.random.normal(key, (2, 8), dtype=jnp.float32) * 5.0
    out1 = jax.block_until_ready(dimension_embedding(x1, dim=DIM, freq=FREQ))
    ref1 = _reference(x1, dim=DIM, freq=FREQ)
    assert out1.shape == (2, 8 * 2 * DIM), out1.shape
    assert jnp.allclose(out1, ref1, atol=1e-5, rtol=1e-5), "mismatch vs reference (case 1)"

    # Case 2: ragged value count (M = 15, not a multiple of G or 8) exercises
    # the pad-and-slice tail path.
    x2 = jax.random.normal(jax.random.PRNGKey(1), (3, 5), dtype=jnp.float32) * 5.0
    out2 = jax.block_until_ready(dimension_embedding(x2, dim=DIM, freq=FREQ))
    ref2 = _reference(x2, dim=DIM, freq=FREQ)
    assert out2.shape == (3, 5 * 2 * DIM), out2.shape
    assert jnp.allclose(out2, ref2, atol=1e-5, rtol=1e-5), "mismatch vs reference (case 2)"

    # Case 3: dim that does not divide 128 (dim=48 -> two_dim=96, L=384, G=4),
    # with enough rows to get a multi-step parallel grid.
    x3 = jax.random.normal(jax.random.PRNGKey(2), (2, 100), dtype=jnp.float32) * 5.0
    out3 = jax.block_until_ready(dimension_embedding(x3, dim=48, freq=FREQ))
    ref3 = _reference(x3, dim=48, freq=FREQ)
    assert out3.shape == (2, 100 * 2 * 48), out3.shape
    assert jnp.allclose(out3, ref3, atol=1e-5, rtol=1e-5), "mismatch vs reference (case 3)"

    print("KERNEL_OK")
</pallas_src>

<mosaic_0001>
module attributes {stable_mosaic.version = 11 : i64} {
  func.func @_dim_emb_kernel(%arg0: i32, %arg1: memref<8x2xf32, #tpu.memory_space<vmem>>, %arg2: memref<1x128xf32, #tpu.memory_space<vmem>>, %arg3: memref<1x128xf32, #tpu.memory_space<vmem>>, %arg4: memref<8x128xf32, #tpu.memory_space<vmem>>) attributes {dimension_semantics = [#tpu.dimension_semantics<parallel>], iteration_bounds = array<i64: 1>, scalar_prefetch = 0 : i64, scratch_operands = 0 : i64, tpu.core_type = #tpu.core_type<tc>, window_params = [{transform_indices = @transform_0, window_bounds = array<i64: 8, 2>}, {pipeline_mode = #tpu.pipeline_mode<synchronous>, transform_indices = @transform_1, window_bounds = array<i64: 1, 128>}, {pipeline_mode = #tpu.pipeline_mode<synchronous>, transform_indices = @transform_2, window_bounds = array<i64: 1, 128>}, {transform_indices = @transform_3, window_bounds = array<i64: 8, 128>}]} {
    %c0 = arith.constant 0 : index
    %c0_0 = arith.constant 0 : index
    %0 = vector.load %arg1[%c0, %c0_0] : memref<8x2xf32, #tpu.memory_space<vmem>>, vector<8x2xf32>
    %1 = vector.extract_strided_slice %0 {offsets = [0, 0], sizes = [8, 1], strides = [1, 1]} : vector<8x2xf32> to vector<8x1xf32>
    %2 = vector.shape_cast %1 : vector<8x1xf32> to vector<8x1xf32>
    %3 = vector.broadcast %2 : vector<8x1xf32> to vector<8x64xf32>
    %4 = vector.extract_strided_slice %0 {offsets = [0, 1], sizes = [8, 1], strides = [1, 1]} : vector<8x2xf32> to vector<8x1xf32>
    %5 = vector.shape_cast %4 : vector<8x1xf32> to vector<8x1xf32>
    %6 = vector.broadcast %5 : vector<8x1xf32> to vector<8x64xf32>
    %7 = tpu.concatenate %3, %6 in 1 : vector<8x64xf32>, vector<8x64xf32> -> vector<8x128xf32>
    %c0_1 = arith.constant 0 : index
    %c0_2 = arith.constant 0 : index
    %8 = vector.load %arg2[%c0_1, %c0_2] : memref<1x128xf32, #tpu.memory_space<vmem>>, vector<1x128xf32>
    %9 = vector.broadcast %8 : vector<1x128xf32> to vector<8x128xf32>
    %10 = arith.mulf %7, %9 : vector<8x128xf32>
    %c0_3 = arith.constant 0 : index
    %c0_4 = arith.constant 0 : index
    %11 = vector.load %arg3[%c0_3, %c0_4] : memref<1x128xf32, #tpu.memory_space<vmem>>, vector<1x128xf32>
    %12 = vector.broadcast %11 : vector<1x128xf32> to vector<8x128xf32>
    %13 = arith.addf %10, %12 : vector<8x128xf32>
    %14 = math.sin %13 : vector<8x128xf32>
    %c0_5 = arith.constant 0 : index
    %c0_6 = arith.constant 0 : index
    %15 = vector.load %arg4[%c0_5, %c0_6] : memref<8x128xf32, #tpu.memory_space<vmem>>, vector<8x128xf32>
    tpu.vector_store %arg4[%c0_5, %c0_6], %14 {strides = array<i32>} : memref<8x128xf32, #tpu.memory_space<vmem>>, vector<8x128xf32>,
    return
  }
  func.func @transform_0(%arg0: i32) -> (i32, i32) {
    %c0_i32 = arith.constant 0 : i32
    %c0_i32_0 = arith.constant 0 : i32
    return %arg0, %c0_i32 : i32, i32
  }
  func.func @transform_1(%arg0: i32) -> (i32, i32) {
    %c0_i32 = arith.constant 0 : i32
    %c0_i32_0 = arith.constant 0 : i32
    %c0_i32_1 = arith.constant 0 : i32
    return %c0_i32, %c0_i32_0 : i32, i32
  }
  func.func @transform_2(%arg0: i32) -> (i32, i32) {
    %c0_i32 = arith.constant 0 : i32
    %c0_i32_0 = arith.constant 0 : i32
    %c0_i32_1 = arith.constant 0 : i32
    return %c0_i32, %c0_i32_0 : i32, i32
  }
  func.func @transform_3(%arg0: i32) -> (i32, i32) {
    %c0_i32 = arith.constant 0 : i32
    %c0_i32_0 = arith.constant 0 : i32
    return %arg0, %c0_i32 : i32, i32
  }
}

</mosaic_0001>

<llo_original>
// kernel: tpu_custom_call.1
$region0: #{tpu_custom_call.1}
  #allocation0 [shape = 'u32[]', space=smem, size = 0x4, offset = 0x4, fixed_abs, tag = 'smem constant byte address 0x4 - core index']
  #allocation1 [shape = 'u32[144,128]{1,0:T(1,128)}', space=vmem, size = 0x12000, scoped, tag = 'internal scratch']
  %s0 = inlined_call_operand.vmem [shape: f32[8,2], index: 0, kind: input, shape index: {}]
  %s1 = inlined_call_operand.vmem [shape: f32[1,128], index: 1, kind: input, shape index: {}]
  %s2 = inlined_call_operand.vmem [shape: f32[1,128], index: 2, kind: input, shape index: {}]
  %s3 = inlined_call_operand.hbm [shape: f32[8,128], index: 3, kind: output, shape index: {}]
  %s4 = sld [smem:[#allocation0]]
  $region22: #{tpu_custom_call.1} parent=0
    _
  %s6 = ssub.s32 1, %s4
  %s7 = scalar_select 0, %s6, %s4
  $region1: #{tpu_custom_call.1} parent=0
    #allocation2 [shape = 'u8[4096]{0}', space=vmem, size = 0x1000, scoped, tag = 'output window, operand 0, single buffered']
    #allocation3 [shape = 's32[1]{0}', space=sflag, size = 0x4, scoped, tag = 'scoped memory for tpu_custom_call.1']
    %8 = vsyncpa [#allocation3], 0
    // Predicated region
    $region2: #{tpu_custom_call.1} parent=1 // pred_check
      _
    $region3: #{tpu_custom_call.1} parent=1 // pred_check_branch
      %10 = sbr.rel (0) target = $region5
    $region4: #{tpu_custom_call.1} parent=1 // pred_region
      _
    $region5: #{tpu_custom_call.1} parent=1 // pred_fallthru
      _
    // Predicated region
    $region6: #{tpu_custom_call.1} parent=1 // pred_check
      _
    $region7: #{tpu_custom_call.1} parent=1 // pred_check_branch
      %12 = sbr.rel (0) target = $region9
    $region8: #{tpu_custom_call.1} parent=1 // pred_region
      _
    $region9: #{tpu_custom_call.1} parent=1 // pred_fallthru
      _
    // Predicated region
    $region10: #{tpu_custom_call.1} parent=1 // pred_check
      _
    $region11: #{tpu_custom_call.1} parent=1 // pred_check_branch
      %14 = sbr.rel (0) target = $region13
    $region12: #{tpu_custom_call.1} parent=1 // pred_region
      _
    $region13: #{tpu_custom_call.1} parent=1 // pred_fallthru
      _
    %v15 = vld [vmem:[%s0] sm:$0xff]
    %17 = vset.pattern.permute.xlu0 0
    %18 = vperm.xlu0 %17, %v15
    %v19 = vpop.permute.xlu0 %18
    %21 = vset.pattern.permute.xlu0 1
    %22 = vperm.xlu0 %21, %v15
    %v23 = vpop.permute.xlu0 %22
    %vm25 = vcmask 523264
    %v26 = vsel %vm25, %v19, %v23
    %v27 = vld [vmem:[%s1] sm:$0x1]
    %v29 = vlaneseq
    %v30 = vshrl.u32 %v29, 7
    %v31 = vsub.s32 0, %v30
    %v32 = vrot.slane %v27, %v31
    %v34 = vmul.f32 %v26, %v32
    %v35 = vld [vmem:[%s2] sm:$0x1]
    %v37 = vlaneseq
    %v38 = vshrl.u32 %v37, 7
    %v39 = vsub.s32 0, %v38
    %v40 = vrot.slane %v35, %v39
    %v42 = vadd.f32 %v34, %v40
    %v43 = vand.u32 2147483647, %v42
    %vm44 = vcmp.le.f32.partialorder %v43, 0.7853982
    %vm45 = vcmp.lt.s32.totalorder %v42, 0
    %v46 = vand.u32 %v42, 2139095040
    %v47 = vshrl.u32 %v46, 23
    %v48 = vsub.s32 %v47, 127
    %v49 = vand.u32 2147483647, %v42
    %v50 = vand.u32 %v49, 8388607
    %v51 = vor.u32 %v50, 8388608
    %v52 = vsub.s32 0, %v51
    %v53 = vadd.s32 %v48, 1
    %vm54 = vcmp.gt.s32.totalorder %v53, 0
    %v55 = vsel %vm54, %v53, 0
    %v56 = vshrl.u32 %v55, 5
    %v57 = vand.u32 %v55, 31
    %v58 = vsub.s32 32, %v57
    %v59 = vshrl.u32 683565275, %v58
    %v60 = vshll.u32 683565275, %v57
    %v61 = vshrl.u32 2475754826, %v58
    %v62 = vor.u32 %v60, %v61
    %v63 = vshll.u32 2475754826, %v57
    %v64 = vshrl.u32 2131351028, %v58
    %v65 = vor.u32 %v63, %v64
    %v66 = vshll.u32 2131351028, %v57
    %v67 = vshrl.u32 2102212464, %v58
    %v68 = vor.u32 %v66, %v67
    %v69 = vshll.u32 2102212464, %v57
    %v70 = vshrl.u32 920167782, %v58
    %v71 = vor.u32 %v69, %v70
    %v72 = vshll.u32 920167782, %v57
    %v73 = vshrl.u32 1326507024, %v58
    %v74 = vor.u32 %v72, %v73
    %vm75 = vcmp.lt.s32.totalorder %v56, 1
    %vm76 = vcmp.lt.s32.totalorder %v56, 2
    %vm77 = vcmp.lt.s32.totalorder %v56, 3
    %vm78 = vcmp.lt.s32.totalorder %v56, 4
    %v79 = vsel %vm75, %v59, %v62
    %v80 = vsel %vm78, %v68, 2102212464
    %v81 = vsel %vm77, %v65, %v80
    %v82 = vsel %vm76, %v79, %v81
    %v83 = vsel %vm75, %v62, %v65
    %v84 = vsel %vm78, %v71, 920167782
    %v85 = vsel %vm77, %v68, %v84
    %v86 = vsel %vm76, %v83, %v85
    %v87 = vsel %vm75, %v65, %v68
    %v88 = vsel %vm78, %v74, 1326507024
    %v89 = vsel %vm77, %v71, %v88
    %v90 = vsel %vm76, %v87, %v89
    %v91 = vshll.u32 %v51, 8
    %v92 = vmul.u32.u64.compose %v91, %v90
    %v93 = vextract.low.u32 %v92
    %v94 = vextract.high.u32 %v92
    %v95 = vmul.u32.u64.compose %v91, %v86
    %v96 = vextract.low.u32 %v95
    %v97 = vextract.high.u32 %v95
    %v98 = vmul.u32 %v91, %v82
    %v99 = vadd.s32 %v94, %v96
    %vm100 = vc.u32 %v94, %v96
    %v101 = vadd.s32 %v97, 1
    %v102 = vsel %vm100, %v101, %v97
    %v103 = vadd.s32 %v98, %v102
    %v104 = vadd.s32 %v103, 536870912
    %v105 = vshrl.u32 %v104, 30
    %v106 = vshll.u32 %v105, 30
    %v107 = vsub.s32 %v103, %v106
    %vm108 = vcmp.lt.s32.totalorder %v107, 0
    %v109 = vsub.s32 0, %v107
    %v110 = vsel %vm108, %v109, %v107
    %v111 = vclz %v110
    %v112 = vsub.s32 %v111, 2
    %vm113 = vcmp.gt.s32.totalorder 0, %v112
    %v114 = vsel %vm113, 0, %v112
    %v115 = vsub.s32 32, %v114
    %v116 = vshll.u32 %v107, %v114
    %v117 = vshrl.u32 %v99, %v115
    %v118 = vor.u32 %v116, %v117
    %v119 = vsub.s32 4294967266, %v114
    %v120 = vadd.s32 %v119, 127
    %v121 = vshll.u32 %v120, 23
    %v122 = vor.u32 4788187, %v121
    %v123 = vand.u32 2147483647, %v122
    %v125 = vcvt.s32.f32 %v118
    %v126 = vmul.f32 %v125, %v123
    %v127 = vxor.u32 %v126, 2147483648
    %v128 = vsel %vm45, %v127, %v126
    %v129 = vsub.s32 4, %v105
    %v130 = vsel %vm45, %v129, %v105
    %v131 = vsel %vm44, %v42, %v128
    %v132 = vsel %vm44, 0, %v130
    %v133 = vcosq.f32.pop %v131
    %v134 = vsinq.f32.pop %v131
    %vm135 = vweird.f32 %v42
    %v136 = vadd.s32 %v132, 3
    %v137 = vand.u32 %v136, 3
    %vm138 = vcmp.lt.s32.totalorder %v137, 2
    %vm139 = vcmp.eq.s32.totalorder %v137, 0
    %v140 = vxor.u32 %v134, 2147483648
    %v141 = vsel %vm139, %v133, %v140
    %vm142 = vcmp.eq.s32.totalorder %v137, 2
    %v143 = vxor.u32 %v133, 2147483648
    %v144 = vsel %vm142, %v143, %v134
    %v145 = vsel %vm138, %v141, %v144
    %v146 = vsel %vm135, nan, %v145
    %147 = vst [vmem:[#allocation2] sm:$0xff] %v146
    // Predicated region
    $region14: #{tpu_custom_call.1} parent=1 // pred_check
      _
    $region15: #{tpu_custom_call.1} parent=1 // pred_check_branch
      %149 = sbr.rel (0) target = $region17
    $region16: #{tpu_custom_call.1} parent=1 // pred_region
      %s151 = ssub.s32 128, 128
      %152 = vsyncadd [#allocation3], %s151
      %s154 = sshll.u32 [#allocation2], 4
      %s155 = int_to_ptr.vmem [resolvable:$true] %s154
      %157 = dma.vmem_to_hbm [thread:$0]  %s155, 128, %s3, [#allocation3]
    $region17: #{tpu_custom_call.1} parent=1 // pred_fallthru
      _
    // Predicated region
    $region18: #{tpu_custom_call.1} parent=1 // pred_check
      _
    $region19: #{tpu_custom_call.1} parent=1 // pred_check_branch
      %159 = sbr.rel (0) target = $region21
    $region20: #{tpu_custom_call.1} parent=1 // pred_region
      %160 = dma.done [#allocation3], 128
    $region21: #{tpu_custom_call.1} parent=1 // pred_fallthru
      _
    %161 = vsyncpa [#allocation3], 1

</llo_original>
